<compile_context>
chip_gen: v5e
topology: v5e:2x2
jax: 0.10.0
libtpu: 0.0.40
codegen_flags: <defaults>
</compile_context>

<pallas_src>
import functools

import jax
import jax.numpy as jnp
from jax.experimental import pallas as pl
from jax.experimental.pallas import tpu as pltpu


# ---------------------------------------------------------------------------
# Kernel: one batch tile x one K tile of the fused contraction + prob. head
# ---------------------------------------------------------------------------
def _fused_head_kernel(x_ref, w_ref, b_ref, out_ref, acc_ref, *, binary: bool):
    # x: [TB, TK] bf16, w: [TK, C] bf16, b: [1, C] f32, out: [TB, C] f32
    # acc: [TB, C] f32 scratch, resident across the K axis (last grid dim).
    k = pl.program_id(1)

    @pl.when(k == 0)
    def _init():
        acc_ref[...] = jnp.zeros_like(acc_ref)

    acc_ref[...] += jnp.dot(x_ref[...], w_ref[...],
                            preferred_element_type=jnp.float32)

    @pl.when(k == pl.num_programs(1) - 1)
    def _epilogue():
        logits = acc_ref[...] + b_ref[...]
        if binary:
            # Columns are [-z, z]; sigmoid(-z) = 1 - sigmoid(z) (and is the
            # numerically correct form for confident predictions).
            probs = jax.nn.sigmoid(logits)
        else:
            m = jnp.max(logits, axis=-1, keepdims=True)
            e = jnp.exp(logits - m)
            probs = e / jnp.sum(e, axis=-1, keepdims=True)   # exact; DMA-hidden
        out_ref[...] = probs.astype(out_ref.dtype)


# ---------------------------------------------------------------------------
# Tiling helpers
# ---------------------------------------------------------------------------
_MAX_TK = 2048   # K tile (multiple of 128); D is padded to a multiple of it
_MAX_TB = 2048   # batch-tile ceiling (roofline plateaus well before this)


def _round_up(x: int, m: int) -> int:
    return ((x + m - 1) // m) * m


def _cdiv(a: int, b: int) -> int:
    return -(-a // b)


def _pow2_floor(x: int) -> int:
    return 1 << (max(int(x), 1).bit_length() - 1)


def _vmem_limit_bytes() -> int:
    """Chip-aware VMEM limit: generous on v5e/v6e (128 MiB), safe on v7x (64 MiB)."""
    try:
        cap = int(pltpu.get_tpu_info().vmem_capacity_bytes)
    except Exception:
        cap = 64 * 1024 * 1024          # conservative fallback (v7x per-TC physical)
    return min(cap * 3 // 4, 96 * 1024 * 1024)


def _choose_tiles(b_pad: int, d: int, out_cols: int, vmem_limit: int):
    """Pick (TB, TK, D_pad) so double-buffered x/out streams + the resident
    double-buffered weight + bias + f32 accumulator fit comfortably in VMEM."""
    d128 = _round_up(d, 128)
    if d128 <= _MAX_TK:
        tk, d_pad = d128, d128          # single K step: weight stays VMEM-resident
    else:
        tk, d_pad = _MAX_TK, _round_up(d128, _MAX_TK)

    budget = vmem_limit // 2            # leave half the limit as compiler headroom
    # double-buffered bf16 weight tile + double-buffered f32 bias
    weight_bytes = 2 * tk * out_cols * 2 + 2 * out_cols * 4
    # per batch-row: double-buffered bf16 x + double-buffered f32 out + f32 acc
    per_row = 2 * tk * 2 + 2 * out_cols * 4 + out_cols * 4
    tb = _pow2_floor((budget - weight_bytes) // per_row)
    tb = max(16, min(_MAX_TB, tb))      # multiple of 16 (bf16 sublane packing)

    # Guarantee >=2 (ideally >=4) batch-grid steps when B allows, so the
    # "parallel" axis shards across both TensorCores on v7x and the
    # input/output streams actually pipeline.
    if b_pad >= 64:
        tb = min(tb, max(16, _round_up(_cdiv(b_pad, 4), 16)))
    elif b_pad >= 32:
        tb = min(tb, max(16, _round_up(_cdiv(b_pad, 2), 16)))
    return min(tb, b_pad), tk, d_pad


# ---------------------------------------------------------------------------
# Wrapper
# ---------------------------------------------------------------------------
def linear_model_wrapper_forward(x_nchw, backbone_w, backbone_b, coef, intercept,
                                 *, compute_dtype=jnp.bfloat16):
    """Fused backbone + sklearn linear-classifier + probability head on TPU.

    Args:
      x_nchw:     [B, C, H, W] float32 input (PyTorch NCHW convention).
      backbone_w: [D, F] synthetic backbone weight (D = C*H*W).
      backbone_b: [F]    synthetic backbone bias.
      coef:       sklearn coef_      -> (1, F) for binary, (num_classes, F) otherwise.
      intercept:  sklearn intercept_ -> (1,)   for binary, (num_classes,)    otherwise.
    """
    B = x_nchw.shape[0]
    D, F = backbone_w.shape

    binary = coef.shape[0] == 1
    out_cols = 2 if binary else int(coef.shape[0])

    wb = backbone_w.astype(jnp.float32)                 # [D, F]
    bb = backbone_b.reshape(1, F).astype(jnp.float32)   # [1, F]
    wc = coef.T.astype(jnp.float32)                     # [F, 1] or [F, C]
    bc = intercept.reshape(1, -1).astype(jnp.float32)   # [1, 1] or [1, C]

    # Algebraic fusion of the two stacked linear layers (exact up to f32 rounding):
    #   logits = x @ (wb @ wc) + (bb @ wc + bc)
    w_fused = wb @ wc                                    # [D, 1] or [D, C]
    b_fused = bb @ wc + bc                               # [1, 1] or [1, C]

    if binary:
        # Fold both class probabilities into one MXU matmul: columns [-z, z].
        w_fused = jnp.concatenate([-w_fused, w_fused], axis=1)   # [D, 2]
        b_fused = jnp.concatenate([-b_fused, b_fused], axis=1)   # [1, 2]

    b_pad = _round_up(max(B, 1), 16)                     # <=15 extra rows; fuses with cast
    vmem_limit = _vmem_limit_bytes()
    TB, TK, d_pad = _choose_tiles(b_pad, D, out_cols, vmem_limit)

    # Stream-dtype operands: bf16 halves HBM traffic on the dominant [B, D]
    # stream; accumulation stays f32 on the MXU.
    x2d = x_nchw.reshape(B, D).astype(compute_dtype)     # torch.flatten(x, 1) equivalent
    x2d = jnp.pad(x2d, ((0, b_pad - B), (0, d_pad - D)))
    w_k = jnp.pad(w_fused, ((0, d_pad - D), (0, 0))).astype(compute_dtype)
    b_k = b_fused.astype(jnp.float32)

    grid = (_cdiv(b_pad, TB), d_pad // TK)               # last (possibly partial) batch block masked
    kernel = functools.partial(_fused_head_kernel, binary=binary)

    # TODO(synk): for heads with thousands of classes, additionally tile the
    # output-column dimension instead of keeping the whole [TK, C] weight tile
    # resident.
    out = pl.pallas_call(
        kernel,
        out_shape=jax.ShapeDtypeStruct((b_pad, out_cols), jnp.float32),
        grid=grid,
        in_specs=[
            pl.BlockSpec((TB, TK), lambda i, k: (i, k)),          # streamed x tile
            pl.BlockSpec((TK, out_cols), lambda i, k: (k, 0)),    # fused weight (resident when one K step)
            pl.BlockSpec((1, out_cols), lambda i, k: (0, 0)),     # fused bias
        ],
        out_specs=pl.BlockSpec((TB, out_cols), lambda i, k: (i, 0)),
        scratch_shapes=[pltpu.VMEM((TB, out_cols), jnp.float32)],  # f32 accumulator
        compiler_params=pltpu.CompilerParams(
            dimension_semantics=("parallel", "arbitrary"),         # megacore batch, reduction K
            vmem_limit_bytes=vmem_limit,
        ),
    )(x2d, w_k, b_k)

    return out[:B]


# ---------------------------------------------------------------------------
# References for sanity checks
# ---------------------------------------------------------------------------
def _reference(x_nchw, backbone_w, backbone_b, coef, intercept):
    """Pure-JAX f32 reference, un-fused two-matmul path (module semantics)."""
    B = x_nchw.shape[0]
    feats = x_nchw.reshape(B, -1) @ backbone_w + backbone_b
    logits = feats @ coef.T + intercept
    if coef.shape[0] == 1:
        p1 = jax.nn.sigmoid(logits)
        return jnp.concatenate([1.0 - p1, p1], axis=1)
    return jax.nn.softmax(logits, axis=1)


def _reference_bf16(x_nchw, backbone_w, backbone_b, coef, intercept):
    """Reference matching the kernel's numerics (fused weights, bf16 streams)."""
    B = x_nchw.shape[0]
    D, F = backbone_w.shape
    wb = backbone_w.astype(jnp.float32)
    bb = backbone_b.reshape(1, F).astype(jnp.float32)
    wc = coef.T.astype(jnp.float32)
    bc = intercept.reshape(1, -1).astype(jnp.float32)
    w_f = wb @ wc
    b_f = bb @ wc + bc
    binary = coef.shape[0] == 1
    if binary:
        w_f = jnp.concatenate([-w_f, w_f], axis=1)
        b_f = jnp.concatenate([-b_f, b_f], axis=1)
    x2 = x_nchw.reshape(B, D).astype(jnp.bfloat16)
    logits = jnp.dot(x2, w_f.astype(jnp.bfloat16),
                     preferred_element_type=jnp.float32) + b_f
    if binary:
        return jax.nn.sigmoid(logits)
    return jax.nn.softmax(logits, axis=1)


if __name__ == "__main__":
    key = jax.random.PRNGKey(0)
    k_x, k_wb, k_bb, k_wc, k_bc, k_wm, k_bm = jax.random.split(key, 7)

    # Small shapes consistent with the module's forward: NCHW image input,
    # backbone producing F features, sklearn classifier head.
    B, C, H, W = 2, 4, 16, 16
    D = C * H * W          # 1024
    F = 32                 # backbone feature dim (num_filters)

    x = jax.random.normal(k_x, (B, C, H, W), dtype=jnp.float32)
    backbone_w = jax.random.normal(k_wb, (D, F), dtype=jnp.float32) * 0.02
    backbone_b = jax.random.normal(k_bb, (F,), dtype=jnp.float32) * 0.02

    fwd = jax.jit(linear_model_wrapper_forward)

    # --- binary sklearn classifier: coef_ (1, F), intercept_ (1,) ---
    coef2 = jax.random.normal(k_wc, (1, F), dtype=jnp.float32) * 0.1
    intercept2 = jax.random.normal(k_bc, (1,), dtype=jnp.float32) * 0.1

    out2 = jax.block_until_ready(fwd(x, backbone_w, backbone_b, coef2, intercept2))
    assert out2.shape == (B, 2), out2.shape
    ref2_f32 = _reference(x, backbone_w, backbone_b, coef2, intercept2)
    ref2_bf16 = _reference_bf16(x, backbone_w, backbone_b, coef2, intercept2)
    # loose vs exact-f32 module semantics (bf16 stream rounding)
    assert jnp.allclose(out2, ref2_f32, atol=1e-2, rtol=1e-2), (out2, ref2_f32)
    # tight vs numerics-matched reference
    assert jnp.allclose(out2, ref2_bf16, atol=1e-4, rtol=1e-4), (out2, ref2_bf16)
    assert jnp.allclose(out2.sum(axis=1), 1.0, atol=1e-5)

    # --- multiclass classifier: coef_ (num_classes, F), intercept_ (num_classes,) ---
    NC = 4
    coef_m = jax.random.normal(k_wm, (NC, F), dtype=jnp.float32) * 0.1
    intercept_m = jax.random.normal(k_bm, (NC,), dtype=jnp.float32) * 0.1

    out_m = jax.block_until_ready(fwd(x, backbone_w, backbone_b, coef_m, intercept_m))
    assert out_m.shape == (B, NC), out_m.shape
    ref_m_f32 = _reference(x, backbone_w, backbone_b, coef_m, intercept_m)
    ref_m_bf16 = _reference_bf16(x, backbone_w, backbone_b, coef_m, intercept_m)
    assert jnp.allclose(out_m, ref_m_f32, atol=1e-2, rtol=1e-2), (out_m, ref_m_f32)
    assert jnp.allclose(out_m, ref_m_bf16, atol=1e-4, rtol=1e-4), (out_m, ref_m_bf16)
    # exact softmax division -> rows sum to 1 (tight check restored)
    assert jnp.allclose(out_m.sum(axis=1), 1.0, atol=1e-5)

    print("KERNEL_OK")
</pallas_src>

<mosaic_0001>
module attributes {stable_mosaic.version = 11 : i64} {
  func.func @_fused_head_kernel(%arg0: i32, %arg1: i32, %arg2: memref<16x1024xbf16, #tpu.memory_space<vmem>>, %arg3: memref<1024x2xbf16, #tpu.memory_space<vmem>>, %arg4: memref<1x2xf32, #tpu.memory_space<vmem>>, %arg5: memref<16x2xf32, #tpu.memory_space<vmem>>, %arg6: memref<16x2xf32, #tpu.memory_space<vmem>>) attributes {dimension_semantics = [#tpu.dimension_semantics<parallel>, #tpu.dimension_semantics<arbitrary>], iteration_bounds = array<i64: 1, 1>, scalar_prefetch = 0 : i64, scratch_operands = 1 : i64, tpu.core_type = #tpu.core_type<tc>, window_params = [{transform_indices = @transform_0, window_bounds = array<i64: 16, 1024>}, {transform_indices = @transform_1, window_bounds = array<i64: 1024, 2>}, {pipeline_mode = #tpu.pipeline_mode<synchronous>, transform_indices = @transform_2, window_bounds = array<i64: 1, 2>}, {transform_indices = @transform_3, window_bounds = array<i64: 16, 2>}]} {
    %c0_i32 = arith.constant 0 : i32
    %0 = arith.cmpi eq, %arg1, %c0_i32 : i32
    %1 = arith.extui %0 : i1 to i32
    %c0_i32_0 = arith.constant 0 : i32
    %2 = arith.cmpi ne, %1, %c0_i32_0 : i32
    scf.if %2 {
      %cst_10 = arith.constant 0.000000e+00 : f32
      %12 = vector.broadcast %cst_10 : f32 to vector<16x2xf32>
      %c0_11 = arith.constant 0 : index
      %c0_12 = arith.constant 0 : index
      %13 = vector.load %arg6[%c0_11, %c0_12] : memref<16x2xf32, #tpu.memory_space<vmem>>, vector<16x2xf32>
      tpu.vector_store %arg6[%c0_11, %c0_12], %12 {strides = array<i32>} : memref<16x2xf32, #tpu.memory_space<vmem>>, vector<16x2xf32>,
    } else {
    }
    %c0 = arith.constant 0 : index
    %c0_1 = arith.constant 0 : index
    %3 = vector.load %arg6[%c0, %c0_1] : memref<16x2xf32, #tpu.memory_space<vmem>>, vector<16x2xf32>
    %c0_2 = arith.constant 0 : index
    %c0_3 = arith.constant 0 : index
    %4 = vector.load %arg2[%c0_2, %c0_3] : memref<16x1024xbf16, #tpu.memory_space<vmem>>, vector<16x1024xbf16>
    %c0_4 = arith.constant 0 : index
    %c0_5 = arith.constant 0 : index
    %5 = vector.load %arg3[%c0_4, %c0_5] : memref<1024x2xbf16, #tpu.memory_space<vmem>>, vector<1024x2xbf16>
    %cst = arith.constant dense<0.000000e+00> : vector<16x2xf32>
    %6 = tpu.matmul %4, %5, %cst {dimension_numbers = #tpu.dot_dimension_numbers<[1], [0], [0], [1], [0, 0, 1, 1], [], []>} : vector<16x1024xbf16>, vector<1024x2xbf16>, vector<16x2xf32> -> vector<16x2xf32>
    %7 = arith.addf %3, %6 : vector<16x2xf32>
    %c0_6 = arith.constant 0 : index
    %c0_7 = arith.constant 0 : index
    %8 = vector.load %arg6[%c0_6, %c0_7] : memref<16x2xf32, #tpu.memory_space<vmem>>, vector<16x2xf32>
    tpu.vector_store %arg6[%c0_6, %c0_7], %7 {strides = array<i32>} : memref<16x2xf32, #tpu.memory_space<vmem>>, vector<16x2xf32>,
    %c0_i32_8 = arith.constant 0 : i32
    %9 = arith.cmpi eq, %arg1, %c0_i32_8 : i32
    %10 = arith.extui %9 : i1 to i32
    %c0_i32_9 = arith.constant 0 : i32
    %11 = arith.cmpi ne, %10, %c0_i32_9 : i32
    scf.if %11 {
      %c0_10 = arith.constant 0 : index
      %c0_11 = arith.constant 0 : index
      %12 = vector.load %arg6[%c0_10, %c0_11] : memref<16x2xf32, #tpu.memory_space<vmem>>, vector<16x2xf32>
      %c0_12 = arith.constant 0 : index
      %c0_13 = arith.constant 0 : index
      %13 = vector.load %arg4[%c0_12, %c0_13] : memref<1x2xf32, #tpu.memory_space<vmem>>, vector<1x2xf32>
      %14 = vector.broadcast %13 : vector<1x2xf32> to vector<16x2xf32>
      %15 = arith.addf %12, %14 : vector<16x2xf32>
      %16 = arith.negf %15 : vector<16x2xf32>
      %17 = math.exp %16 : vector<16x2xf32>
      %cst_14 = arith.constant 1.000000e+00 : f32
      %18 = vector.broadcast %cst_14 : f32 to vector<16x2xf32>
      %19 = arith.addf %18, %17 : vector<16x2xf32>
      %20 = arith.divf %18, %19 : vector<16x2xf32>
      %c0_15 = arith.constant 0 : index
      %c0_16 = arith.constant 0 : index
      %21 = vector.load %arg5[%c0_15, %c0_16] : memref<16x2xf32, #tpu.memory_space<vmem>>, vector<16x2xf32>
      tpu.vector_store %arg5[%c0_15, %c0_16], %20 {strides = array<i32>} : memref<16x2xf32, #tpu.memory_space<vmem>>, vector<16x2xf32>,
    } else {
    }
    return
  }
  func.func @transform_0(%arg0: i32, %arg1: i32) -> (i32, i32) {
    %c0_i32 = arith.constant 0 : i32
    return %arg0, %arg1 : i32, i32
  }
  func.func @transform_1(%arg0: i32, %arg1: i32) -> (i32, i32) {
    %c0_i32 = arith.constant 0 : i32
    %c0_i32_0 = arith.constant 0 : i32
    return %arg1, %c0_i32 : i32, i32
  }
  func.func @transform_2(%arg0: i32, %arg1: i32) -> (i32, i32) {
    %c0_i32 = arith.constant 0 : i32
    %c0_i32_0 = arith.constant 0 : i32
    %c0_i32_1 = arith.constant 0 : i32
    return %c0_i32, %c0_i32_0 : i32, i32
  }
  func.func @transform_3(%arg0: i32, %arg1: i32) -> (i32, i32) {
    %c0_i32 = arith.constant 0 : i32
    %c0_i32_0 = arith.constant 0 : i32
    return %arg0, %c0_i32 : i32, i32
  }
}

</mosaic_0001>

<llo_original>
// kernel: linear_model_wrapper_forward.1
$region0: #{linear_model_wrapper_forward.1}
  #allocation0 [shape = 'u32[]', space=smem, size = 0x4, offset = 0x4, fixed_abs, tag = 'smem constant byte address 0x4 - core index']
  #allocation1 [shape = 'u32[72,128]{1,0:T(1,128)}', space=vmem, size = 0x9000, scoped, tag = 'internal scratch']
  #allocation2 [shape = 'f32[16,2]{1,0:T(8,128)}', space=vmem, size = 0x2000, scoped, tag = 'scratch operand']
  %s0 = inlined_call_operand.vmem [shape: bf16[16,1024], index: 0, kind: input, shape index: {}]
  %s1 = inlined_call_operand.vmem [shape: bf16[1024,2], index: 1, kind: input, shape index: {}]
  %s2 = inlined_call_operand.vmem [shape: f32[1,2], index: 2, kind: input, shape index: {}]
  %s3 = inlined_call_operand.vmem [shape: f32[16,2], index: 3, kind: output, shape index: {}]
  %s4 = sld [smem:[#allocation0]]
  $region30: #{linear_model_wrapper_forward.1} parent=0
    _
  %s6 = ssub.s32 1, %s4
  %s7 = scalar_select 0, %s6, %s4
  // Predicated region
  $region2: #{linear_model_wrapper_forward.1} parent=0 // pred_check
    _
  $region3: #{linear_model_wrapper_forward.1} parent=0 // pred_check_branch
    %9 = sbr.rel (0) target = $region5
  $region4: #{linear_model_wrapper_forward.1} parent=0 // pred_region
    _
  $region5: #{linear_model_wrapper_forward.1} parent=0 // pred_fallthru
    _
  // Predicated region
  $region6: #{linear_model_wrapper_forward.1} parent=0 // pred_check
    _
  $region7: #{linear_model_wrapper_forward.1} parent=0 // pred_check_branch
    %11 = sbr.rel (0) target = $region9
  $region8: #{linear_model_wrapper_forward.1} parent=0 // pred_region
    _
  $region9: #{linear_model_wrapper_forward.1} parent=0 // pred_fallthru
    _
  // Predicated region
  $region10: #{linear_model_wrapper_forward.1} parent=0 // pred_check
    _
  $region11: #{linear_model_wrapper_forward.1} parent=0 // pred_check_branch
    %13 = sbr.rel (0) target = $region13
  $region12: #{linear_model_wrapper_forward.1} parent=0 // pred_region
    _
  $region13: #{linear_model_wrapper_forward.1} parent=0 // pred_fallthru
    _
  %p14 = scmp.eq.s32.totalorder 0, 0
  // Predicated region
  $region14: #{linear_model_wrapper_forward.1} parent=0 // pred_check
    %p15 = pneg %p14
  $region15: #{linear_model_wrapper_forward.1} parent=0 // pred_check_branch
    %17 = sbr.rel (%p15) target = $region17
  $region16: #{linear_model_wrapper_forward.1} parent=0 // pred_region
    %vm18 = vcmask 15360
    %19 = vst.msk [vmem:[#allocation2] sm:$0xff] %vm18, 0.0
    %20 = vst.msk [vmem:[#allocation2 + $0x8] sm:$0xff] %vm18, 0.0
  $region17: #{linear_model_wrapper_forward.1} parent=0 // pred_fallthru
    _
  %v21 = vld [vmem:[#allocation2] sm:$0xff]
  %v22 = vld [vmem:[#allocation2 + $0x8] sm:$0xff]
  %v23 = vld [vmem:[%s0] sm:$0xff]
  %v24 = vld [vmem:[%s0 + $0x8] sm:$0xff]
  %v25 = vld [vmem:[%s0 + $0x10] sm:$0xff]
  %v26 = vld [vmem:[%s0 + $0x18] sm:$0xff]
  %v27 = vld [vmem:[%s0 + $0x20] sm:$0xff]
  %v28 = vld [vmem:[%s0 + $0x28] sm:$0xff]
  %v29 = vld [vmem:[%s0 + $0x30] sm:$0xff]
  %v30 = vld [vmem:[%s0 + $0x38] sm:$0xff]
  %v31 = vld [vmem:[%s1] sm:$0xf]
  %v32 = vld [vmem:[%s1 + $0x4] sm:$0xf]
  %v33 = vld [vmem:[%s1 + $0x8] sm:$0xf]
  %v34 = vld [vmem:[%s1 + $0xc] sm:$0xf]
  %v35 = vld [vmem:[%s1 + $0x10] sm:$0xf]
  %v36 = vld [vmem:[%s1 + $0x14] sm:$0xf]
  %v37 = vld [vmem:[%s1 + $0x18] sm:$0xf]
  %v38 = vld [vmem:[%s1 + $0x1c] sm:$0xf]
  %v39 = vld [vmem:[%s1 + $0x20] sm:$0xf]
  %v40 = vld [vmem:[%s1 + $0x24] sm:$0xf]
  %v41 = vld [vmem:[%s1 + $0x28] sm:$0xf]
  %v42 = vld [vmem:[%s1 + $0x2c] sm:$0xf]
  %v43 = vld [vmem:[%s1 + $0x30] sm:$0xf]
  %v44 = vld [vmem:[%s1 + $0x34] sm:$0xf]
  %v45 = vld [vmem:[%s1 + $0x38] sm:$0xf]
  %v46 = vld [vmem:[%s1 + $0x3c] sm:$0xf]
  %v47 = vld [vmem:[%s1 + $0x40] sm:$0xf]
  %v48 = vld [vmem:[%s1 + $0x44] sm:$0xf]
  %v49 = vld [vmem:[%s1 + $0x48] sm:$0xf]
  %v50 = vld [vmem:[%s1 + $0x4c] sm:$0xf]
  %v51 = vld [vmem:[%s1 + $0x50] sm:$0xf]
  %v52 = vld [vmem:[%s1 + $0x54] sm:$0xf]
  %v53 = vld [vmem:[%s1 + $0x58] sm:$0xf]
  %v54 = vld [vmem:[%s1 + $0x5c] sm:$0xf]
  %v55 = vld [vmem:[%s1 + $0x60] sm:$0xf]
  %v56 = vld [vmem:[%s1 + $0x64] sm:$0xf]
  %v57 = vld [vmem:[%s1 + $0x68] sm:$0xf]
  %v58 = vld [vmem:[%s1 + $0x6c] sm:$0xf]
  %v59 = vld [vmem:[%s1 + $0x70] sm:$0xf]
  %v60 = vld [vmem:[%s1 + $0x74] sm:$0xf]
  %v61 = vld [vmem:[%s1 + $0x78] sm:$0xf]
  %v62 = vld [vmem:[%s1 + $0x7c] sm:$0xf]
  %v63 = vld [vmem:[%s1 + $0x80] sm:$0xf]
  %v64 = vld [vmem:[%s1 + $0x84] sm:$0xf]
  %v65 = vld [vmem:[%s1 + $0x88] sm:$0xf]
  %v66 = vld [vmem:[%s1 + $0x8c] sm:$0xf]
  %v67 = vld [vmem:[%s1 + $0x90] sm:$0xf]
  %v68 = vld [vmem:[%s1 + $0x94] sm:$0xf]
  %v69 = vld [vmem:[%s1 + $0x98] sm:$0xf]
  %v70 = vld [vmem:[%s1 + $0x9c] sm:$0xf]
  %v71 = vld [vmem:[%s1 + $0xa0] sm:$0xf]
  %v72 = vld [vmem:[%s1 + $0xa4] sm:$0xf]
  %v73 = vld [vmem:[%s1 + $0xa8] sm:$0xf]
  %v74 = vld [vmem:[%s1 + $0xac] sm:$0xf]
  %v75 = vld [vmem:[%s1 + $0xb0] sm:$0xf]
  %v76 = vld [vmem:[%s1 + $0xb4] sm:$0xf]
  %v77 = vld [vmem:[%s1 + $0xb8] sm:$0xf]
  %v78 = vld [vmem:[%s1 + $0xbc] sm:$0xf]
  %v79 = vld [vmem:[%s1 + $0xc0] sm:$0xf]
  %v80 = vld [vmem:[%s1 + $0xc4] sm:$0xf]
  %v81 = vld [vmem:[%s1 + $0xc8] sm:$0xf]
  %v82 = vld [vmem:[%s1 + $0xcc] sm:$0xf]
  %v83 = vld [vmem:[%s1 + $0xd0] sm:$0xf]
  %v84 = vld [vmem:[%s1 + $0xd4] sm:$0xf]
  %v85 = vld [vmem:[%s1 + $0xd8] sm:$0xf]
  %v86 = vld [vmem:[%s1 + $0xdc] sm:$0xf]
  %v87 = vld [vmem:[%s1 + $0xe0] sm:$0xf]
  %v88 = vld [vmem:[%s1 + $0xe4] sm:$0xf]
  %v89 = vld [vmem:[%s1 + $0xe8] sm:$0xf]
  %v90 = vld [vmem:[%s1 + $0xec] sm:$0xf]
  %v91 = vld [vmem:[%s1 + $0xf0] sm:$0xf]
  %v92 = vld [vmem:[%s1 + $0xf4] sm:$0xf]
  %v93 = vld [vmem:[%s1 + $0xf8] sm:$0xf]
  %v94 = vld [vmem:[%s1 + $0xfc] sm:$0xf]
  %v95 = vld [vmem:[%s1 + $0x100] sm:$0xf]
  %v96 = vld [vmem:[%s1 + $0x104] sm:$0xf]
  %v97 = vld [vmem:[%s1 + $0x108] sm:$0xf]
  %v98 = vld [vmem:[%s1 + $0x10c] sm:$0xf]
  %v99 = vld [vmem:[%s1 + $0x110] sm:$0xf]
  %v100 = vld [vmem:[%s1 + $0x114] sm:$0xf]
  %v101 = vld [vmem:[%s1 + $0x118] sm:$0xf]
  %v102 = vld [vmem:[%s1 + $0x11c] sm:$0xf]
  %v103 = vld [vmem:[%s1 + $0x120] sm:$0xf]
  %v104 = vld [vmem:[%s1 + $0x124] sm:$0xf]
  %v105 = vld [vmem:[%s1 + $0x128] sm:$0xf]
  %v106 = vld [vmem:[%s1 + $0x12c] sm:$0xf]
  %v107 = vld [vmem:[%s1 + $0x130] sm:$0xf]
  %v108 = vld [vmem:[%s1 + $0x134] sm:$0xf]
  %v109 = vld [vmem:[%s1 + $0x138] sm:$0xf]
  %v110 = vld [vmem:[%s1 + $0x13c] sm:$0xf]
  %v111 = vld [vmem:[%s1 + $0x140] sm:$0xf]
  %v112 = vld [vmem:[%s1 + $0x144] sm:$0xf]
  %v113 = vld [vmem:[%s1 + $0x148] sm:$0xf]
  %v114 = vld [vmem:[%s1 + $0x14c] sm:$0xf]
  %v115 = vld [vmem:[%s1 + $0x150] sm:$0xf]
  %v116 = vld [vmem:[%s1 + $0x154] sm:$0xf]
  %v117 = vld [vmem:[%s1 + $0x158] sm:$0xf]
  %v118 = vld [vmem:[%s1 + $0x15c] sm:$0xf]
  %v119 = vld [vmem:[%s1 + $0x160] sm:$0xf]
  %v120 = vld [vmem:[%s1 + $0x164] sm:$0xf]
  %v121 = vld [vmem:[%s1 + $0x168] sm:$0xf]
  %v122 = vld [vmem:[%s1 + $0x16c] sm:$0xf]
  %v123 = vld [vmem:[%s1 + $0x170] sm:$0xf]
  %v124 = vld [vmem:[%s1 + $0x174] sm:$0xf]
  %v125 = vld [vmem:[%s1 + $0x178] sm:$0xf]
  %v126 = vld [vmem:[%s1 + $0x17c] sm:$0xf]
  %v127 = vld [vmem:[%s1 + $0x180] sm:$0xf]
  %v128 = vld [vmem:[%s1 + $0x184] sm:$0xf]
  %v129 = vld [vmem:[%s1 + $0x188] sm:$0xf]
  %v130 = vld [vmem:[%s1 + $0x18c] sm:$0xf]
  %v131 = vld [vmem:[%s1 + $0x190] sm:$0xf]
  %v132 = vld [vmem:[%s1 + $0x194] sm:$0xf]
  %v133 = vld [vmem:[%s1 + $0x198] sm:$0xf]
  %v134 = vld [vmem:[%s1 + $0x19c] sm:$0xf]
  %v135 = vld [vmem:[%s1 + $0x1a0] sm:$0xf]
  %v136 = vld [vmem:[%s1 + $0x1a4] sm:$0xf]
  %v137 = vld [vmem:[%s1 + $0x1a8] sm:$0xf]
  %v138 = vld [vmem:[%s1 + $0x1ac] sm:$0xf]
  %v139 = vld [vmem:[%s1 + $0x1b0] sm:$0xf]
  %v140 = vld [vmem:[%s1 + $0x1b4] sm:$0xf]
  %v141 = vld [vmem:[%s1 + $0x1b8] sm:$0xf]
  %v142 = vld [vmem:[%s1 + $0x1bc] sm:$0xf]
  %v143 = vld [vmem:[%s1 + $0x1c0] sm:$0xf]
  %v144 = vld [vmem:[%s1 + $0x1c4] sm:$0xf]
  %v145 = vld [vmem:[%s1 + $0x1c8] sm:$0xf]
  %v146 = vld [vmem:[%s1 + $0x1cc] sm:$0xf]
  %v147 = vld [vmem:[%s1 + $0x1d0] sm:$0xf]
  %v148 = vld [vmem:[%s1 + $0x1d4] sm:$0xf]
  %v149 = vld [vmem:[%s1 + $0x1d8] sm:$0xf]
  %v150 = vld [vmem:[%s1 + $0x1dc] sm:$0xf]
  %v151 = vld [vmem:[%s1 + $0x1e0] sm:$0xf]
  %v152 = vld [vmem:[%s1 + $0x1e4] sm:$0xf]
  %v153 = vld [vmem:[%s1 + $0x1e8] sm:$0xf]
  %v154 = vld [vmem:[%s1 + $0x1ec] sm:$0xf]
  %v155 = vld [vmem:[%s1 + $0x1f0] sm:$0xf]
  %v156 = vld [vmem:[%s1 + $0x1f4] sm:$0xf]
  %v157 = vld [vmem:[%s1 + $0x1f8] sm:$0xf]
  %v158 = vld [vmem:[%s1 + $0x1fc] sm:$0xf]
  %v167 = vunpack.c.l.b16 %v23
  %v168 = vunpack.c.h.b16 %v23
  %v169 = vunpack.c.l.b16 %v24
  %v170 = vunpack.c.h.b16 %v24
  %v171 = vunpack.c.l.b16 %v25
  %v172 = vunpack.c.h.b16 %v25
  %v173 = vunpack.c.l.b16 %v26
  %v174 = vunpack.c.h.b16 %v26
  %v175 = vunpack.c.l.b16 %v27
  %v176 = vunpack.c.h.b16 %v27
  %v177 = vunpack.c.l.b16 %v28
  %v178 = vunpack.c.h.b16 %v28
  %v179 = vunpack.c.l.b16 %v29
  %v180 = vunpack.c.h.b16 %v29
  %v181 = vunpack.c.l.b16 %v30
  %v182 = vunpack.c.h.b16 %v30
  %v183 = vpack.c.b16 %v175, %v167
  %v184 = vpack.c.b16 %v176, %v168
  %v185 = vpack.c.b16 %v177, %v169
  %v186 = vpack.c.b16 %v178, %v170
  %v187 = vpack.c.b16 %v179, %v171
  %v188 = vpack.c.b16 %v180, %v172
  %v189 = vpack.c.b16 %v181, %v173
  %v190 = vpack.c.b16 %v182, %v174
  %v327 = vunpack.c.l.b16 %v31
  %v328 = vunpack.c.l.b16 %v32
  %v329 = vunpack.c.l.b16 %v33
  %v330 = vunpack.c.l.b16 %v34
  %v331 = vunpack.c.l.b16 %v35
  %v332 = vunpack.c.l.b16 %v36
  %v333 = vunpack.c.l.b16 %v37
  %v334 = vunpack.c.l.b16 %v38
  %v335 = vunpack.c.l.b16 %v39
  %v336 = vunpack.c.l.b16 %v40
  %v337 = vunpack.c.l.b16 %v41
  %v338 = vunpack.c.l.b16 %v42
  %v339 = vunpack.c.l.b16 %v43
  %v340 = vunpack.c.l.b16 %v44
  %v341 = vunpack.c.l.b16 %v45
  %v342 = vunpack.c.l.b16 %v46
  %v343 = vunpack.c.l.b16 %v47
  %v344 = vunpack.c.l.b16 %v48
  %v345 = vunpack.c.l.b16 %v49
  %v346 = vunpack.c.l.b16 %v50
  %v347 = vunpack.c.l.b16 %v51
  %v348 = vunpack.c.l.b16 %v52
  %v349 = vunpack.c.l.b16 %v53
  %v350 = vunpack.c.l.b16 %v54
  %v351 = vunpack.c.l.b16 %v55
  %v352 = vunpack.c.l.b16 %v56
  %v353 = vunpack.c.l.b16 %v57
  %v354 = vunpack.c.l.b16 %v58
  %v355 = vunpack.c.l.b16 %v59
  %v356 = vunpack.c.l.b16 %v60
  %v357 = vunpack.c.l.b16 %v61
  %v358 = vunpack.c.l.b16 %v62
  %v359 = vunpack.c.l.b16 %v63
  %v360 = vunpack.c.l.b16 %v64
  %v361 = vunpack.c.l.b16 %v65
  %v362 = vunpack.c.l.b16 %v66
  %v363 = vunpack.c.l.b16 %v67
  %v364 = vunpack.c.l.b16 %v68
  %v365 = vunpack.c.l.b16 %v69
  %v366 = vunpack.c.l.b16 %v70
  %v367 = vunpack.c.l.b16 %v71
  %v368 = vunpack.c.l.b16 %v72
  %v369 = vunpack.c.l.b16 %v73
  %v370 = vunpack.c.l.b16 %v74
  %v371 = vunpack.c.l.b16 %v75
  %v372 = vunpack.c.l.b16 %v76
  %v373 = vunpack.c.l.b16 %v77
  %v374 = vunpack.c.l.b16 %v78
  %v375 = vunpack.c.l.b16 %v79
  %v376 = vunpack.c.l.b16 %v80
  %v377 = vunpack.c.l.b16 %v81
  %v378 = vunpack.c.l.b16 %v82
  %v379 = vunpack.c.l.b16 %v83
  %v380 = vunpack.c.l.b16 %v84
  %v381 = vunpack.c.l.b16 %v85
  %v382 = vunpack.c.l.b16 %v86
  %v383 = vunpack.c.l.b16 %v87
  %v384 = vunpack.c.l.b16 %v88
  %v385 = vunpack.c.l.b16 %v89
  %v386 = vunpack.c.l.b16 %v90
  %v387 = vunpack.c.l.b16 %v91
  %v388 = vunpack.c.l.b16 %v92
  %v389 = vunpack.c.l.b16 %v93
  %v390 = vunpack.c.l.b16 %v94
  %v391 = vunpack.c.l.b16 %v95
  %v392 = vunpack.c.l.b16 %v96
  %v393 = vunpack.c.l.b16 %v97
  %v394 = vunpack.c.l.b16 %v98
  %v395 = vunpack.c.l.b16 %v99
  %v396 = vunpack.c.l.b16 %v100
  %v397 = vunpack.c.l.b16 %v101
  %v398 = vunpack.c.l.b16 %v102
  %v399 = vunpack.c.l.b16 %v103
  %v400 = vunpack.c.l.b16 %v104
  %v401 = vunpack.c.l.b16 %v105
  %v402 = vunpack.c.l.b16 %v106
  %v403 = vunpack.c.l.b16 %v107
  %v404 = vunpack.c.l.b16 %v108
  %v405 = vunpack.c.l.b16 %v109
  %v406 = vunpack.c.l.b16 %v110
  %v407 = vunpack.c.l.b16 %v111
  %v408 = vunpack.c.l.b16 %v112
  %v409 = vunpack.c.l.b16 %v113
  %v410 = vunpack.c.l.b16 %v114
  %v411 = vunpack.c.l.b16 %v115
  %v412 = vunpack.c.l.b16 %v116
  %v413 = vunpack.c.l.b16 %v117
  %v414 = vunpack.c.l.b16 %v118
  %v415 = vunpack.c.l.b16 %v119
  %v416 = vunpack.c.l.b16 %v120
  %v417 = vunpack.c.l.b16 %v121
  %v418 = vunpack.c.l.b16 %v122
  %v419 = vunpack.c.l.b16 %v123
  %v420 = vunpack.c.l.b16 %v124
  %v421 = vunpack.c.l.b16 %v125
  %v422 = vunpack.c.l.b16 %v126
  %v423 = vunpack.c.l.b16 %v127
  %v424 = vunpack.c.l.b16 %v128
  %v425 = vunpack.c.l.b16 %v129
  %v426 = vunpack.c.l.b16 %v130
  %v427 = vunpack.c.l.b16 %v131
  %v428 = vunpack.c.l.b16 %v132
  %v429 = vunpack.c.l.b16 %v133
  %v430 = vunpack.c.l.b16 %v134
  %v431 = vunpack.c.l.b16 %v135
  %v432 = vunpack.c.l.b16 %v136
  %v433 = vunpack.c.l.b16 %v137
  %v434 = vunpack.c.l.b16 %v138
  %v435 = vunpack.c.l.b16 %v139
  %v436 = vunpack.c.l.b16 %v140
  %v437 = vunpack.c.l.b16 %v141
  %v438 = vunpack.c.l.b16 %v142
  %v439 = vunpack.c.l.b16 %v143
  %v440 = vunpack.c.l.b16 %v144
  %v441 = vunpack.c.l.b16 %v145
  %v442 = vunpack.c.l.b16 %v146
  %v443 = vunpack.c.l.b16 %v147
  %v444 = vunpack.c.l.b16 %v148
  %v445 = vunpack.c.l.b16 %v149
  %v446 = vunpack.c.l.b16 %v150
  %v447 = vunpack.c.l.b16 %v151
  %v448 = vunpack.c.l.b16 %v152
  %v449 = vunpack.c.l.b16 %v153
  %v450 = vunpack.c.l.b16 %v154
  %v451 = vunpack.c.l.b16 %v155
  %v452 = vunpack.c.l.b16 %v156
  %v453 = vunpack.c.l.b16 %v157
  %v454 = vunpack.c.l.b16 %v158
  %v455 = vpack.c.b16 %v328, %v327
  %v456 = vpack.c.b16 %v330, %v329
  %v457 = vpack.c.b16 %v332, %v331
  %v458 = vpack.c.b16 %v334, %v333
  %v459 = vpack.c.b16 %v336, %v335
  %v460 = vpack.c.b16 %v338, %v337
  %v461 = vpack.c.b16 %v340, %v339
  %v462 = vpack.c.b16 %v342, %v341
  %v463 = vpack.c.b16 %v344, %v343
  %v464 = vpack.c.b16 %v346, %v345
  %v465 = vpack.c.b16 %v348, %v347
  %v466 = vpack.c.b16 %v350, %v349
  %v467 = vpack.c.b16 %v352, %v351
  %v468 = vpack.c.b16 %v354, %v353
  %v469 = vpack.c.b16 %v356, %v355
  %v470 = vpack.c.b16 %v358, %v357
  %v471 = vpack.c.b16 %v360, %v359
  %v472 = vpack.c.b16 %v362, %v361
  %v473 = vpack.c.b16 %v364, %v363
  %v474 = vpack.c.b16 %v366, %v365
  %v475 = vpack.c.b16 %v368, %v367
  %v476 = vpack.c.b16 %v370, %v369
  %v477 = vpack.c.b16 %v372, %v371
  %v478 = vpack.c.b16 %v374, %v373
  %v479 = vpack.c.b16 %v376, %v375
  %v480 = vpack.c.b16 %v378, %v377
  %v481 = vpack.c.b16 %v380, %v379
  %v482 = vpack.c.b16 %v382, %v381
  %v483 = vpack.c.b16 %v384, %v383
  %v484 = vpack.c.b16 %v386, %v385
  %v485 = vpack.c.b16 %v388, %v387
  %v486 = vpack.c.b16 %v390, %v389
  %v487 = vpack.c.b16 %v392, %v391
  %v488 = vpack.c.b16 %v394, %v393
  %v489 = vpack.c.b16 %v396, %v395
  %v490 = vpack.c.b16 %v398, %v397
  %v491 = vpack.c.b16 %v400, %v399
  %v492 = vpack.c.b16 %v402, %v401
  %v493 = vpack.c.b16 %v404, %v403
  %v494 = vpack.c.b16 %v406, %v405
  %v495 = vpack.c.b16 %v408, %v407
  %v496 = vpack.c.b16 %v410, %v409
  %v497 = vpack.c.b16 %v412, %v411
  %v498 = vpack.c.b16 %v414, %v413
  %v499 = vpack.c.b16 %v416, %v415
  %v500 = vpack.c.b16 %v418, %v417
  %v501 = vpack.c.b16 %v420, %v419
  %v502 = vpack.c.b16 %v422, %v421
  %v503 = vpack.c.b16 %v424, %v423
  %v504 = vpack.c.b16 %v426, %v425
  %v505 = vpack.c.b16 %v428, %v427
  %v506 = vpack.c.b16 %v430, %v429
  %v507 = vpack.c.b16 %v432, %v431
  %v508 = vpack.c.b16 %v434, %v433
  %v509 = vpack.c.b16 %v436, %v435
  %v510 = vpack.c.b16 %v438, %v437
  %v511 = vpack.c.b16 %v440, %v439
  %v512 = vpack.c.b16 %v442, %v441
  %v513 = vpack.c.b16 %v444, %v443
  %v514 = vpack.c.b16 %v446, %v445
  %v515 = vpack.c.b16 %v448, %v447
  %v516 = vpack.c.b16 %v450, %v449
  %v517 = vpack.c.b16 %v452, %v451
  %v518 = vpack.c.b16 %v454, %v453
  %583 = vmatpush.bf16.msra.mxu0 %v462
  %584 = vmatpush.bf16.msra.mxu0 %v461
  %585 = vmatpush.bf16.msra.mxu0 %v460
  %586 = vmatpush.bf16.msra.mxu0 %v459
  %587 = vmatpush.bf16.msra.mxu0 %v458
  %588 = vmatpush.bf16.msra.mxu0 %v457
  %589 = vmatpush.bf16.msra.mxu0 %v456
  %590 = vmatpush.bf16.msra.mxu0 %v455
  %591 = vmatmul.bf16.gmra.mxu0 %v183
  %v592 = vpop.f32.mrf.mxu0
  %v593 = vadd.f32 0.0, %v592
  %v594 = vpop.f32.mrf.mxu0
  %v595 = vadd.f32 0.0, %v594
  %596 = vdwg.mxu0
  %597 = vmatpush.bf16.msra.mxu0 %v470
  %598 = vmatpush.bf16.msra.mxu0 %v469
  %599 = vmatpush.bf16.msra.mxu0 %v468
  %600 = vmatpush.bf16.msra.mxu0 %v467
  %601 = vmatpush.bf16.msra.mxu0 %v466
  %602 = vmatpush.bf16.msra.mxu0 %v465
  %603 = vmatpush.bf16.msra.mxu0 %v464
  %604 = vmatpush.bf16.msra.mxu0 %v463
  %605 = vmatmul.bf16.gmra.mxu0 %v184
  %v606 = vpop.f32.mrf.mxu0
  %v607 = vadd.f32 %v593, %v606
  %v608 = vpop.f32.mrf.mxu0
  %v609 = vadd.f32 %v595, %v608
  %610 = vdwg.mxu0
  %611 = vmatpush.bf16.msra.mxu0 %v478
  %612 = vmatpush.bf16.msra.mxu0 %v477
  %613 = vmatpush.bf16.msra.mxu0 %v476
  %614 = vmatpush.bf16.msra.mxu0 %v475
  %615 = vmatpush.bf16.msra.mxu0 %v474
  %616 = vmatpush.bf16.msra.mxu0 %v473
  %617 = vmatpush.bf16.msra.mxu0 %v472
  %618 = vmatpush.bf16.msra.mxu0 %v471
  %619 = vmatmul.bf16.gmra.mxu0 %v185
  %v620 = vpop.f32.mrf.mxu0
  %v621 = vadd.f32 %v607, %v620
  %v622 = vpop.f32.mrf.mxu0
  %v623 = vadd.f32 %v609, %v622
  %624 = vdwg.mxu0
  %625 = vmatpush.bf16.msra.mxu0 %v486
  %626 = vmatpush.bf16.msra.mxu0 %v485
  %627 = vmatpush.bf16.msra.mxu0 %v484
  %628 = vmatpush.bf16.msra.mxu0 %v483
  %629 = vmatpush.bf16.msra.mxu0 %v482
  %630 = vmatpush.bf16.msra.mxu0 %v481
  %631 = vmatpush.bf16.msra.mxu0 %v480
  %632 = vmatpush.bf16.msra.mxu0 %v479
  %633 = vmatmul.bf16.gmra.mxu0 %v186
  %v634 = vpop.f32.mrf.mxu0
  %v635 = vadd.f32 %v621, %v634
  %v636 = vpop.f32.mrf.mxu0
  %v637 = vadd.f32 %v623, %v636
  %638 = vdwg.mxu0
  %639 = vmatpush.bf16.msra.mxu0 %v494
  %640 = vmatpush.bf16.msra.mxu0 %v493
  %641 = vmatpush.bf16.msra.mxu0 %v492
  %642 = vmatpush.bf16.msra.mxu0 %v491
  %643 = vmatpush.bf16.msra.mxu0 %v490
  %644 = vmatpush.bf16.msra.mxu0 %v489
  %645 = vmatpush.bf16.msra.mxu0 %v488
  %646 = vmatpush.bf16.msra.mxu0 %v487
  %647 = vmatmul.bf16.gmra.mxu0 %v187
  %v648 = vpop.f32.mrf.mxu0
  %v649 = vadd.f32 %v635, %v648
  %v650 = vpop.f32.mrf.mxu0
  %v651 = vadd.f32 %v637, %v650
  %652 = vdwg.mxu0
  %653 = vmatpush.bf16.msra.mxu0 %v502
  %654 = vmatpush.bf16.msra.mxu0 %v501
  %655 = vmatpush.bf16.msra.mxu0 %v500
  %656 = vmatpush.bf16.msra.mxu0 %v499
  %657 = vmatpush.bf16.msra.mxu0 %v498
  %658 = vmatpush.bf16.msra.mxu0 %v497
  %659 = vmatpush.bf16.msra.mxu0 %v496
  %660 = vmatpush.bf16.msra.mxu0 %v495
  %661 = vmatmul.bf16.gmra.mxu0 %v188
  %v662 = vpop.f32.mrf.mxu0
  %v663 = vadd.f32 %v649, %v662
  %v664 = vpop.f32.mrf.mxu0
  %v665 = vadd.f32 %v651, %v664
  %666 = vdwg.mxu0
  %667 = vmatpush.bf16.msra.mxu0 %v510
  %668 = vmatpush.bf16.msra.mxu0 %v509
  %669 = vmatpush.bf16.msra.mxu0 %v508
  %670 = vmatpush.bf16.msra.mxu0 %v507
  %671 = vmatpush.bf16.msra.mxu0 %v506
  %672 = vmatpush.bf16.msra.mxu0 %v505
  %673 = vmatpush.bf16.msra.mxu0 %v504
  %674 = vmatpush.bf16.msra.mxu0 %v503
  %675 = vmatmul.bf16.gmra.mxu0 %v189
  %v676 = vpop.f32.mrf.mxu0
  %v677 = vadd.f32 %v663, %v676
  %v678 = vpop.f32.mrf.mxu0
  %v679 = vadd.f32 %v665, %v678
  %680 = vdwg.mxu0
  %681 = vmatpush.bf16.msra.mxu0 %v518
  %682 = vmatpush.bf16.msra.mxu0 %v517
  %683 = vmatpush.bf16.msra.mxu0 %v516
  %684 = vmatpush.bf16.msra.mxu0 %v515
  %685 = vmatpush.bf16.msra.mxu0 %v514
  %686 = vmatpush.bf16.msra.mxu0 %v513
  %687 = vmatpush.bf16.msra.mxu0 %v512
  %688 = vmatpush.bf16.msra.mxu0 %v511
  %689 = vmatmul.bf16.gmra.mxu0 %v190
  %v690 = vpop.f32.mrf.mxu0
  %v691 = vadd.f32 %v677, %v690
  %v692 = vpop.f32.mrf.mxu0
  %v693 = vadd.f32 %v679, %v692
  %694 = vdwg.mxu0
  %v695 = vadd.f32 %v21, %v691
  %v696 = vadd.f32 %v22, %v693
  %vm697 = vcmask 15360
  %698 = vst.msk [vmem:[#allocation2] sm:$0xff] %vm697, %v695
  %699 = vst.msk [vmem:[#allocation2 + $0x8] sm:$0xff] %vm697, %v696
  // Predicated region
  $region18: #{linear_model_wrapper_forward.1} parent=0 // pred_check
    %p700 = pneg %p14
  $region19: #{linear_model_wrapper_forward.1} parent=0 // pred_check_branch
    %702 = sbr.rel (%p700) target = $region21
  $region20: #{linear_model_wrapper_forward.1} parent=0 // pred_region
    %v703 = vld [vmem:[#allocation2] sm:$0xff]
    %v704 = vld [vmem:[#allocation2 + $0x8] sm:$0xff]
    %v705 = vld [vmem:[%s2] sm:$0x1]
    %v707 = vperm.slane %v705, 0
    %v709 = vadd.f32 %v703, %v707
    %v710 = vadd.f32 %v704, %v707
    %v711 = vxor.u32 %v709, 2147483648
    %v712 = vxor.u32 %v710, 2147483648
    %v713 = vmul.f32 %v711, 1.442695
    %v714 = vpow.pop %v713
    %v715 = vmul.f32 %v712, 1.442695
    %v716 = vpow.pop %v715
    %v717 = vadd.f32 %v714, 1.0
    %v718 = vadd.f32 %v716, 1.0
    %v719 = vrcp.pop %v717
    %v720 = vmul.f32 %v717, %v719
    %v721 = vsub.f32 1.0, %v720
    %v722 = vmul.f32 %v719, %v721
    %v723 = vadd.f32 %v719, %v722
    %vm724 = vweird.f32 %v717
    %vm725 = vweird.f32 %v719
    %vm726 = vmor %vm724, %vm725
    %v727 = vsel %vm726, %v719, %v723
    %v728 = vand.u32 2147483647, %v717
    %vm729 = vcmp.eq.f32.partialorder %v728, 8.507059e+37
    %v730 = vand.u32 %v717, 2147483648
    %v731 = vor.u32 1.1754944e-38, %v730
    %v732 = vsel %vm729, %v731, %v727
    %v733 = vmul.f32 1.0, %v732
    %v734 = vrcp.pop %v718
    %v735 = vmul.f32 %v718, %v734
    %v736 = vsub.f32 1.0, %v735
    %v737 = vmul.f32 %v734, %v736
    %v738 = vadd.f32 %v734, %v737
    %vm739 = vweird.f32 %v718
    %vm740 = vweird.f32 %v734
    %vm741 = vmor %vm739, %vm740
    %v742 = vsel %vm741, %v734, %v738
    %v743 = vand.u32 2147483647, %v718
    %vm744 = vcmp.eq.f32.partialorder %v743, 8.507059e+37
    %v745 = vand.u32 %v718, 2147483648
    %v746 = vor.u32 1.1754944e-38, %v745
    %v747 = vsel %vm744, %v746, %v742
    %v748 = vmul.f32 1.0, %v747
    %749 = vst.msk [vmem:[%s3] sm:$0xff] %vm697, %v733
    %750 = vst.msk [vmem:[%s3 + $0x8] sm:$0xff] %vm697, %v748
  $region21: #{linear_model_wrapper_forward.1} parent=0 // pred_fallthru
    _
  // Predicated region
  $region22: #{linear_model_wrapper_forward.1} parent=0 // pred_check
    _
  $region23: #{linear_model_wrapper_forward.1} parent=0 // pred_check_branch
    %752 = sbr.rel (0) target = $region25
  $region24: #{linear_model_wrapper_forward.1} parent=0 // pred_region
    _
  $region25: #{linear_model_wrapper_forward.1} parent=0 // pred_fallthru
    _
  // Predicated region
  $region26: #{linear_model_wrapper_forward.1} parent=0 // pred_check
    _
  $region27: #{linear_model_wrapper_forward.1} parent=0 // pred_check_branch
    %754 = sbr.rel (0) target = $region29
  $region28: #{linear_model_wrapper_forward.1} parent=0 // pred_region
    _
  $region29: #{linear_model_wrapper_forward.1} parent=0 // pred_fallthru
    _

</llo_original>
